<compile_context>
chip_gen: v6e
topology: v6e:2x2x1
jax: 0.10.0
libtpu: 0.0.40
codegen_flags: <defaults>
</compile_context>

<pallas_src>
import jax
import jax.numpy as jnp
from jax.experimental import pallas as pl
from jax.experimental.pallas import tpu as pltpu


# ----------------------------------------------------------------------------
# Fused Pallas kernel: conv(im2col, bias folded) + ReLU + fc1 + ReLU + fc2
# ----------------------------------------------------------------------------
def dqn_fused_kernel(pT_ref, wc_ref, w1T_ref, b12_ref, w2_ref, o_ref):
    C_out, hidden, HW = w1T_ref.shape
    B, A = o_ref.shape

    # Conv2d(3x3, pad=1) + bias + ReLU as one transposed im2col matmul.
    # convT: [C_out, B*HW] -> big dim on the lane axis (lane-dense, unmasked).
    # The conv bias is folded in (ones row in pT_ref, bias column in wc_ref).
    convT = jnp.dot(wc_ref[...], pT_ref[...],
                    preferred_element_type=jnp.float32)        # [C_out, B*HW]
    convT = jnp.maximum(convT, 0.0)

    # nn.Flatten() (NCHW order) + fc1, as ONE contraction:
    #   feat[b, c*HW + hw] = convT[c, b*HW + hw]
    #   h[b, n]            = sum_{c,hw} conv3[c, b, hw] * w1T[c, n, hw]
    # The lane split B*HW -> (B, HW) is at a 128-multiple boundary (HW % 128 == 0
    # for the toy 16x16 case), so no expensive relayout.
    conv3 = convT.reshape(C_out, B, HW)                        # [C_out, B, HW]
    partial = jnp.einsum("cbk,cnk->cbn", conv3, w1T_ref[...],
                         preferred_element_type=jnp.float32)   # [C_out, B, hidden]
    h = jnp.sum(partial, axis=0)                               # [B, hidden]

    b1 = b12_ref[0:1, :hidden]                                 # packed biases
    b2 = b12_ref[1:2, :A]
    h = jnp.maximum(h + b1, 0.0)

    # fc2 (tiny; masked output store on [B, A] is negligible — final result).
    q = jnp.dot(h, w2_ref[...], preferred_element_type=jnp.float32) + b2
    o_ref[...] = q.astype(o_ref.dtype)


# ----------------------------------------------------------------------------
# Host-side (XLA) glue: im2col producing the TRANSPOSED patch matrix directly.
# ----------------------------------------------------------------------------
def _im2col_T(x, k, pad):
    """x: [B, C, H, W] -> patchesT [C*k*k, B*H*W], row order (c, kh, kw)."""
    B, C, H, W = x.shape
    xp = jnp.pad(x, ((0, 0), (0, 0), (pad, pad), (pad, pad)))
    slabs = [xp[:, :, di:di + H, dj:dj + W]                 # [B, C, H, W]
             for di in range(k) for dj in range(k)]
    p = jnp.stack(slabs, axis=0).reshape(k, k, B, C, H, W)  # [kh,kw,B,C,H,W]
    p = p.transpose(3, 0, 1, 2, 4, 5)                       # [C,kh,kw,B,H,W]
    return p.reshape(C * k * k, B * H * W)


def pack_params(params):
    """One-time weight packing (call OUTSIDE the jitted step function)."""
    wc, bc, w1, b1, w2, b2 = (params["wc"], params["bc"], params["w1"],
                              params["b1"], params["w2"], params["b2"])
    C_out, C_in, K, _ = wc.shape
    CKK = C_in * K * K
    hidden = w1.shape[1]
    A = w2.shape[1]
    HW = w1.shape[0] // C_out

    # Conv weight with bias folded in as an extra column: [C_out, CKK+1].
    wc_aug = jnp.concatenate([wc.reshape(C_out, CKK), bc.reshape(C_out, 1)],
                             axis=1).astype(jnp.float32)
    # w1 packed lane-dense per output channel: [C_out, hidden, HW].
    w1T3 = w1.reshape(C_out, HW, hidden).transpose(0, 2, 1).astype(jnp.float32)
    # b1 / b2 packed into one tiny array (cuts two DMA descriptors).
    width = max(hidden, A)
    b12 = jnp.zeros((2, width), jnp.float32)
    b12 = b12.at[0, :hidden].set(b1.astype(jnp.float32))
    b12 = b12.at[1, :A].set(b2.astype(jnp.float32))
    return {"wc_aug": wc_aug, "w1T3": w1T3, "b12": b12,
            "w2": w2.astype(jnp.float32)}


def dqn_forward(x, packed):
    """x: [B, C, H, W] NCHW float32. Returns Q-values [B, action_dim]."""
    wc_aug, w1T3, b12, w2 = (packed["wc_aug"], packed["w1T3"],
                             packed["b12"], packed["w2"])
    B, C, H, W = x.shape
    C_out, hidden, HW = w1T3.shape
    A = w2.shape[1]
    CKK1 = wc_aug.shape[1]                       # C*K*K + 1 (bias column)
    K = int(round(((CKK1 - 1) // C) ** 0.5))
    N = B * H * W

    # Activation-dependent layout plumbing (cheap XLA ops, fused under jit).
    # TODO(synk): at realistic sizes move this inside the kernel as shifted
    # pl.ds slices of a VMEM-resident padded input (9x less HBM traffic).
    patchesT = _im2col_T(x, K, K // 2)                          # [CKK, N]
    pT_aug = jnp.concatenate(
        [patchesT, jnp.ones((1, N), patchesT.dtype)], axis=0)   # [CKK+1, N]

    vmem = pl.BlockSpec(memory_space=pltpu.MemorySpace.VMEM)
    cost = pl.CostEstimate(
        flops=2 * C_out * CKK1 * N + 2 * B * hidden * C_out * HW
              + 2 * B * hidden * A,
        transcendentals=0,
        bytes_accessed=4 * (CKK1 * N + C_out * CKK1 + C_out * hidden * HW
                            + b12.size + hidden * A + B * A),
    )

    # Whole problem (~0.5 MiB) is VMEM-resident: no grid, single fused kernel.
    return pl.pallas_call(
        dqn_fused_kernel,
        out_shape=jax.ShapeDtypeStruct((B, A), jnp.float32),
        in_specs=[vmem] * 5,
        out_specs=vmem,
        cost_estimate=cost,
    )(pT_aug, wc_aug, w1T3, b12, w2)


# ----------------------------------------------------------------------------
# Pure-JAX reference (same math, HIGHEST precision) for a correctness check.
# ----------------------------------------------------------------------------
def dqn_reference(x, params):
    wc, bc, w1, b1, w2, b2 = (params["wc"], params["bc"], params["w1"],
                              params["b1"], params["w2"], params["b2"])
    B, C, H, W = x.shape
    C_out, _, K, _ = wc.shape
    HW = H * W
    patchesT = _im2col_T(x, K, K // 2)                          # [CKK, B*HW]
    convT = jnp.dot(wc.reshape(C_out, -1), patchesT,
                    precision=jax.lax.Precision.HIGHEST) + bc[:, None]
    convT = jnp.maximum(convT, 0.0)                             # [C_out, B*HW]
    feat = convT.reshape(C_out, B, HW).transpose(1, 0, 2).reshape(B, C_out * HW)
    h = jnp.maximum(jnp.dot(feat, w1, precision=jax.lax.Precision.HIGHEST) + b1,
                    0.0)
    return jnp.dot(h, w2, precision=jax.lax.Precision.HIGHEST) + b2


def init_params(key, in_channels, conv_channels, h, w, hidden_dim, action_dim,
                k=3):
    """Deterministic synthetic parameter init (PyTorch-like fan-in scaling)."""
    ks = jax.random.split(key, 6)
    feat_dim = conv_channels * h * w

    def uni(kk, shape, fan_in):
        bound = 1.0 / jnp.sqrt(fan_in)
        return jax.random.uniform(kk, shape, jnp.float32, -bound, bound)

    return {
        "wc": uni(ks[0], (conv_channels, in_channels, k, k), in_channels * k * k),
        "bc": uni(ks[1], (conv_channels,), in_channels * k * k),
        "w1": uni(ks[2], (feat_dim, hidden_dim), feat_dim),
        "b1": uni(ks[3], (hidden_dim,), feat_dim),
        "w2": uni(ks[4], (hidden_dim, action_dim), hidden_dim),
        "b2": uni(ks[5], (action_dim,), hidden_dim),
    }


if __name__ == "__main__":
    B, C, H, W = 2, 4, 16, 16      # state: [batch, channels, 16, 16]
    CONV_CH = 8
    HIDDEN = 32
    ACTIONS = 4

    key = jax.random.PRNGKey(0)
    kx, kp = jax.random.split(key)
    x = jax.random.normal(kx, (B, C, H, W), dtype=jnp.float32)
    params = init_params(kp, C, CONV_CH, H, W, HIDDEN, ACTIONS)

    # One-time weight pack (outside the jitted step: no per-call relayout).
    packed = pack_params(params)
    jax.block_until_ready(packed["w1T3"])

    q = jax.jit(dqn_forward)(x, packed)
    jax.block_until_ready(q)
    assert q.shape == (B, ACTIONS) and q.dtype == jnp.float32

    q_ref = jax.jit(dqn_reference)(x, params)
    jax.block_until_ready(q_ref)
    # Kernel uses default MXU f32 precision vs HIGHEST in the reference.
    assert bool(jnp.allclose(q, q_ref, rtol=2e-3, atol=2e-3)), "mismatch vs reference"

    print("KERNEL_OK")
</pallas_src>

<mosaic_0001>
module attributes {stable_mosaic.version = 11 : i64} {
  func.func @dqn_fused_kernel(%arg0: memref<37x512xf32, #tpu.memory_space<vmem>>, %arg1: memref<8x37xf32, #tpu.memory_space<vmem>>, %arg2: memref<8x32x256xf32, #tpu.memory_space<vmem>>, %arg3: memref<2x32xf32, #tpu.memory_space<vmem>>, %arg4: memref<32x4xf32, #tpu.memory_space<vmem>>, %arg5: memref<2x4xf32, #tpu.memory_space<vmem>>) attributes {dimension_semantics = [], scalar_prefetch = 0 : i64, scratch_operands = 0 : i64, tpu.core_type = #tpu.core_type<tc>} {
    %c0 = arith.constant 0 : index
    %c0_0 = arith.constant 0 : index
    %0 = vector.load %arg1[%c0, %c0_0] : memref<8x37xf32, #tpu.memory_space<vmem>>, vector<8x37xf32>
    %c0_1 = arith.constant 0 : index
    %c0_2 = arith.constant 0 : index
    %1 = vector.load %arg0[%c0_1, %c0_2] : memref<37x512xf32, #tpu.memory_space<vmem>>, vector<37x512xf32>
    %cst = arith.constant dense<0.000000e+00> : vector<8x512xf32>
    %2 = tpu.matmul %0, %1, %cst {dimension_numbers = #tpu.dot_dimension_numbers<[1], [0], [0], [1], [0, 0, 1, 1], [], []>} : vector<8x37xf32>, vector<37x512xf32>, vector<8x512xf32> -> vector<8x512xf32>
    %cst_3 = arith.constant 0.000000e+00 : f32
    %3 = vector.broadcast %cst_3 : f32 to vector<8x512xf32>
    %4 = arith.maximumf %2, %3 : vector<8x512xf32>
    %5 = vector.shape_cast %4 : vector<8x512xf32> to vector<8x2x256xf32>
    %c0_4 = arith.constant 0 : index
    %c0_5 = arith.constant 0 : index
    %c0_6 = arith.constant 0 : index
    %6 = vector.load %arg2[%c0_4, %c0_5, %c0_6] : memref<8x32x256xf32, #tpu.memory_space<vmem>>, vector<8x32x256xf32>
    "tpu.trace_start"() <{level = 10 : i32, message = "cbk,cnk->cbn"}> : () -> ()
    %cst_7 = arith.constant dense<0.000000e+00> : vector<8x2x32xf32>
    %7 = tpu.matmul %5, %6, %cst_7 {dimension_numbers = #tpu.dot_dimension_numbers<[2], [2], [1], [1], [0, 0, 0, 1, 1, 1], [0], [0]>} : vector<8x2x256xf32>, vector<8x32x256xf32>, vector<8x2x32xf32> -> vector<8x2x32xf32>
    "tpu.trace_stop"() : () -> ()
    %cst_8 = arith.constant dense<0.000000e+00> : vector<2x32xf32>
    %8 = vector.multi_reduction <add>, %7, %cst_8 [0] : vector<8x2x32xf32> to vector<2x32xf32>
    %c0_9 = arith.constant 0 : index
    %c0_10 = arith.constant 0 : index
    %9 = vector.load %arg3[%c0_9, %c0_10] : memref<2x32xf32, #tpu.memory_space<vmem>>, vector<1x32xf32>
    %c1 = arith.constant 1 : index
    %c0_11 = arith.constant 0 : index
    %10 = vector.load %arg3[%c1, %c0_11] : memref<2x32xf32, #tpu.memory_space<vmem>>, vector<1x4xf32>
    %11 = vector.broadcast %9 : vector<1x32xf32> to vector<2x32xf32>
    %12 = arith.addf %8, %11 : vector<2x32xf32>
    %cst_12 = arith.constant 0.000000e+00 : f32
    %13 = vector.broadcast %cst_12 : f32 to vector<2x32xf32>
    %14 = arith.maximumf %12, %13 : vector<2x32xf32>
    %c0_13 = arith.constant 0 : index
    %c0_14 = arith.constant 0 : index
    %15 = vector.load %arg4[%c0_13, %c0_14] : memref<32x4xf32, #tpu.memory_space<vmem>>, vector<32x4xf32>
    %cst_15 = arith.constant dense<0.000000e+00> : vector<2x4xf32>
    %16 = tpu.matmul %14, %15, %cst_15 {dimension_numbers = #tpu.dot_dimension_numbers<[1], [0], [0], [1], [0, 0, 1, 1], [], []>} : vector<2x32xf32>, vector<32x4xf32>, vector<2x4xf32> -> vector<2x4xf32>
    %17 = vector.broadcast %10 : vector<1x4xf32> to vector<2x4xf32>
    %18 = arith.addf %16, %17 : vector<2x4xf32>
    %c0_16 = arith.constant 0 : index
    %c0_17 = arith.constant 0 : index
    %19 = vector.load %arg5[%c0_16, %c0_17] : memref<2x4xf32, #tpu.memory_space<vmem>>, vector<2x4xf32>
    tpu.vector_store %arg5[%c0_16, %c0_17], %18 {strides = array<i32>} : memref<2x4xf32, #tpu.memory_space<vmem>>, vector<2x4xf32>,
    return
  }
}

</mosaic_0001>

<llo_original>
// kernel: dqn_forward.1
$region0: #{dqn_forward.1}
  #allocation0 [shape = 'u32[]', space=smem, size = 0x4, offset = 0x4, fixed_abs, tag = 'smem constant byte address 0x4 - core index']
  #allocation1 [shape = 'u32[144,128]{1,0:T(1,128)}', space=vmem, size = 0x12000, scoped, tag = 'internal scratch']
  %s0 = inlined_call_operand.vmem [shape: f32[37,512], index: 0, kind: input, shape index: {}]
  %s1 = inlined_call_operand.vmem [shape: f32[8,37], index: 1, kind: input, shape index: {}]
  %s2 = inlined_call_operand.vmem [shape: f32[8,32,256], index: 2, kind: input, shape index: {}]
  %s3 = inlined_call_operand.vmem [shape: f32[2,32], index: 3, kind: input, shape index: {}]
  %s4 = inlined_call_operand.vmem [shape: f32[32,4], index: 4, kind: input, shape index: {}]
  %s5 = inlined_call_operand.hbm [shape: f32[2,4], index: 5, kind: output, shape index: {}]
  %s6 = sld [smem:[#allocation0]]
  $region30: #{dqn_forward.1} parent=0
    _
  %s8 = ssub.s32 1, %s6
  %s9 = scalar_select 0, %s8, %s6
  $region1: #{dqn_forward.1} parent=0
    #allocation2 [shape = 'u8[1024]{0}', space=vmem, size = 0x400, scoped, tag = 'output window, operand 0, single buffered']
    #allocation3 [shape = 's32[1]{0}', space=sflag, size = 0x4, scoped, tag = 'scoped memory for dqn_forward.1']
    %10 = vsyncpa [#allocation3], 0
    // Predicated region
    $region2: #{dqn_forward.1} parent=1 // pred_check
      _
    $region3: #{dqn_forward.1} parent=1 // pred_check_branch
      %12 = sbr.rel (0) target = $region5
    $region4: #{dqn_forward.1} parent=1 // pred_region
      _
    $region5: #{dqn_forward.1} parent=1 // pred_fallthru
      _
    // Predicated region
    $region6: #{dqn_forward.1} parent=1 // pred_check
      _
    $region7: #{dqn_forward.1} parent=1 // pred_check_branch
      %14 = sbr.rel (0) target = $region9
    $region8: #{dqn_forward.1} parent=1 // pred_region
      _
    $region9: #{dqn_forward.1} parent=1 // pred_fallthru
      _
    // Predicated region
    $region10: #{dqn_forward.1} parent=1 // pred_check
      _
    $region11: #{dqn_forward.1} parent=1 // pred_check_branch
      %16 = sbr.rel (0) target = $region13
    $region12: #{dqn_forward.1} parent=1 // pred_region
      _
    $region13: #{dqn_forward.1} parent=1 // pred_fallthru
      _
    // Predicated region
    $region14: #{dqn_forward.1} parent=1 // pred_check
      _
    $region15: #{dqn_forward.1} parent=1 // pred_check_branch
      %18 = sbr.rel (0) target = $region17
    $region16: #{dqn_forward.1} parent=1 // pred_region
      _
    $region17: #{dqn_forward.1} parent=1 // pred_fallthru
      _
    // Predicated region
    $region18: #{dqn_forward.1} parent=1 // pred_check
      _
    $region19: #{dqn_forward.1} parent=1 // pred_check_branch
      %20 = sbr.rel (0) target = $region21
    $region20: #{dqn_forward.1} parent=1 // pred_region
      _
    $region21: #{dqn_forward.1} parent=1 // pred_fallthru
      _
    %v21 = vld [vmem:[%s1] sm:$0xff]
    %v22 = vld [vmem:[%s0] sm:$0xff]
    %v23 = vld [vmem:[%s0 + $0x8] sm:$0xff]
    %v24 = vld [vmem:[%s0 + $0x10] sm:$0xff]
    %v25 = vld [vmem:[%s0 + $0x18] sm:$0xff]
    %v26 = vld [vmem:[%s0 + $0x20] sm:$0xff]
    %v27 = vld [vmem:[%s0 + $0x28] sm:$0xff]
    %v28 = vld [vmem:[%s0 + $0x30] sm:$0xff]
    %v29 = vld [vmem:[%s0 + $0x38] sm:$0xff]
    %v30 = vld [vmem:[%s0 + $0x40] sm:$0xff]
    %v31 = vld [vmem:[%s0 + $0x48] sm:$0xff]
    %v32 = vld [vmem:[%s0 + $0x50] sm:$0xff]
    %v33 = vld [vmem:[%s0 + $0x58] sm:$0xff]
    %v34 = vld [vmem:[%s0 + $0x60] sm:$0xff]
    %v35 = vld [vmem:[%s0 + $0x68] sm:$0xff]
    %v36 = vld [vmem:[%s0 + $0x70] sm:$0xff]
    %v37 = vld [vmem:[%s0 + $0x78] sm:$0xff]
    %v38 = vld [vmem:[%s0 + $0x80] sm:$0x1f]
    %v39 = vld [vmem:[%s0 + $0x88] sm:$0x1f]
    %v40 = vld [vmem:[%s0 + $0x90] sm:$0x1f]
    %v41 = vld [vmem:[%s0 + $0x98] sm:$0x1f]
    %vm42 = vcmask 302080
    %v44 = vsel %vm42, %v21, 0
    %vm46 = vcmask 1044480
    %v48 = vsel %vm46, %v38, 0
    %v51 = vsel %vm46, %v39, 0
    %v54 = vsel %vm46, %v40, 0
    %v57 = vsel %vm46, %v41, 0
    %59 = vmatprep.subr.mxu0 0.0
    %60 = vmatpush1.msra.mxu0 0.0
    %61 = vmatprep.subr.mxu0 0.0
    %62 = vmatpush1.msra.mxu0 0.0
    %63 = vmatprep.subr.mxu0 0.0
    %64 = vmatpush1.msra.mxu0 0.0
    %65 = vmatprep.subr.mxu0 0.0
    %66 = vmatpush1.msra.mxu0 0.0
    %67 = vmatprep.subr.mxu0 0.0
    %68 = vmatpush1.msra.mxu0 0.0
    %69 = vmatprep.subr.mxu0 0.0
    %70 = vmatpush1.msra.mxu0 0.0
    %71 = vmatprep.subr.mxu0 0.0
    %72 = vmatpush1.msra.mxu0 0.0
    %73 = vmatprep.subr.mxu0 0.0
    %74 = vmatpush1.msra.mxu0 0.0
    %75 = vmatprep.subr.mxu0 0.0
    %76 = vmatpush1.msra.mxu0 0.0
    %77 = vmatprep.subr.mxu0 0.0
    %78 = vmatpush1.msra.mxu0 0.0
    %79 = vmatprep.subr.mxu0 0.0
    %80 = vmatpush1.msra.mxu0 0.0
    %81 = vmatprep.subr.mxu0 %v51
    %82 = vmatpush1.msra.mxu0 %v48
    %83 = vmatprep.subr.mxu0 %v35
    %84 = vmatpush1.msra.mxu0 %v34
    %85 = vmatprep.subr.mxu0 %v31
    %86 = vmatpush1.msra.mxu0 %v30
    %87 = vmatprep.subr.mxu0 %v27
    %88 = vmatpush1.msra.mxu0 %v26
    %89 = vmatprep.subr.mxu0 %v23
    %90 = vmatpush1.msra.mxu0 %v22
    %91 = vmatprep.subr.mxu0 0.0
    %92 = vmatpush2.msra.mxu0 0.0
    %93 = vmatprep.subr.mxu0 0.0
    %94 = vmatpush2.msra.mxu0 0.0
    %95 = vmatprep.subr.mxu0 0.0
    %96 = vmatpush2.msra.mxu0 0.0
    %97 = vmatprep.subr.mxu0 0.0
    %98 = vmatpush2.msra.mxu0 0.0
    %99 = vmatprep.subr.mxu0 0.0
    %100 = vmatpush2.msra.mxu0 0.0
    %101 = vmatprep.subr.mxu0 0.0
    %102 = vmatpush2.msra.mxu0 0.0
    %103 = vmatprep.subr.mxu0 0.0
    %104 = vmatpush2.msra.mxu0 0.0
    %105 = vmatprep.subr.mxu0 0.0
    %106 = vmatpush2.msra.mxu0 0.0
    %107 = vmatprep.subr.mxu0 0.0
    %108 = vmatpush2.msra.mxu0 0.0
    %109 = vmatprep.subr.mxu0 0.0
    %110 = vmatpush2.msra.mxu0 0.0
    %111 = vmatprep.subr.mxu0 0.0
    %112 = vmatpush2.msra.mxu0 0.0
    %113 = vmatprep.subr.mxu0 0.0
    %114 = vmatpush2.msra.mxu0 0.0
    %115 = vmatprep.subr.mxu0 0.0
    %116 = vmatpush2.msra.mxu0 0.0
    %117 = vmatprep.subr.mxu0 0.0
    %118 = vmatpush2.msra.mxu0 0.0
    %119 = vmatprep.subr.mxu0 0.0
    %120 = vmatpush2.msra.mxu0 0.0
    %121 = vmatprep.subr.mxu0 0.0
    %122 = vmatpush2.msra.mxu0 0.0
    %123 = vmatprep.mubr.f32.mxu0 0.0
    %124 = vmatmul.mubr.f32.gmra.mxu0 %v44
    %v125 = vpop.f32.mrf.mxu0
    %v126 = vadd.f32 0.0, %v125
    %v127 = vpop.f32.mrf.mxu0
    %v128 = vadd.f32 0.0, %v127
    %129 = vdwg.mxu0
    %130 = vmatprep.subr.mxu0 0.0
    %131 = vmatpush1.msra.mxu0 0.0
    %132 = vmatprep.subr.mxu0 0.0
    %133 = vmatpush1.msra.mxu0 0.0
    %134 = vmatprep.subr.mxu0 0.0
    %135 = vmatpush1.msra.mxu0 0.0
    %136 = vmatprep.subr.mxu0 0.0
    %137 = vmatpush1.msra.mxu0 0.0
    %138 = vmatprep.subr.mxu0 0.0
    %139 = vmatpush1.msra.mxu0 0.0
    %140 = vmatprep.subr.mxu0 0.0
    %141 = vmatpush1.msra.mxu0 0.0
    %142 = vmatprep.subr.mxu0 0.0
    %143 = vmatpush1.msra.mxu0 0.0
    %144 = vmatprep.subr.mxu0 0.0
    %145 = vmatpush1.msra.mxu0 0.0
    %146 = vmatprep.subr.mxu0 0.0
    %147 = vmatpush1.msra.mxu0 0.0
    %148 = vmatprep.subr.mxu0 0.0
    %149 = vmatpush1.msra.mxu0 0.0
    %150 = vmatprep.subr.mxu0 0.0
    %151 = vmatpush1.msra.mxu0 0.0
    %152 = vmatprep.subr.mxu0 %v57
    %153 = vmatpush1.msra.mxu0 %v54
    %154 = vmatprep.subr.mxu0 %v37
    %155 = vmatpush1.msra.mxu0 %v36
    %156 = vmatprep.subr.mxu0 %v33
    %157 = vmatpush1.msra.mxu0 %v32
    %158 = vmatprep.subr.mxu0 %v29
    %159 = vmatpush1.msra.mxu0 %v28
    %160 = vmatprep.subr.mxu0 %v25
    %161 = vmatpush1.msra.mxu0 %v24
    %162 = vmatprep.subr.mxu0 0.0
    %163 = vmatpush2.msra.mxu0 0.0
    %164 = vmatprep.subr.mxu0 0.0
    %165 = vmatpush2.msra.mxu0 0.0
    %166 = vmatprep.subr.mxu0 0.0
    %167 = vmatpush2.msra.mxu0 0.0
    %168 = vmatprep.subr.mxu0 0.0
    %169 = vmatpush2.msra.mxu0 0.0
    %170 = vmatprep.subr.mxu0 0.0
    %171 = vmatpush2.msra.mxu0 0.0
    %172 = vmatprep.subr.mxu0 0.0
    %173 = vmatpush2.msra.mxu0 0.0
    %174 = vmatprep.subr.mxu0 0.0
    %175 = vmatpush2.msra.mxu0 0.0
    %176 = vmatprep.subr.mxu0 0.0
    %177 = vmatpush2.msra.mxu0 0.0
    %178 = vmatprep.subr.mxu0 0.0
    %179 = vmatpush2.msra.mxu0 0.0
    %180 = vmatprep.subr.mxu0 0.0
    %181 = vmatpush2.msra.mxu0 0.0
    %182 = vmatprep.subr.mxu0 0.0
    %183 = vmatpush2.msra.mxu0 0.0
    %184 = vmatprep.subr.mxu0 0.0
    %185 = vmatpush2.msra.mxu0 0.0
    %186 = vmatprep.subr.mxu0 0.0
    %187 = vmatpush2.msra.mxu0 0.0
    %188 = vmatprep.subr.mxu0 0.0
    %189 = vmatpush2.msra.mxu0 0.0
    %190 = vmatprep.subr.mxu0 0.0
    %191 = vmatpush2.msra.mxu0 0.0
    %192 = vmatprep.subr.mxu0 0.0
    %193 = vmatpush2.msra.mxu0 0.0
    %194 = vmatprep.mubr.f32.mxu0 0.0
    %195 = vmatmul.mubr.f32.gmra.mxu0 %v44
    %v196 = vpop.f32.mrf.mxu0
    %v197 = vadd.f32 0.0, %v196
    %v198 = vpop.f32.mrf.mxu0
    %v199 = vadd.f32 0.0, %v198
    %200 = vdwg.mxu0
    %v201 = vmax.f32 %v126, 0.0
    %v202 = vmax.f32 %v128, 0.0
    %v203 = vmax.f32 %v197, 0.0
    %v204 = vmax.f32 %v199, 0.0
    %v205 = vcombine.high %v201, 0.0
    %v207 = vunpack.c.l.s4 1983009808
    %v208 = vunpack.c.0.s8 %v207
    %v209 = vlaneseq
    %v210 = vshrl.u32 %v209, 7
    %v211 = vsub.s32 %v208, %v210
    %v212 = vrot.slane %v201, %v211
    %v214 = vunpack.c.l.s4 1983009808
    %v215 = vunpack.c.0.s8 %v214
    %v216 = vlaneseq
    %v217 = vshrl.u32 %v216, 7
    %v218 = vsub.s32 %v215, %v217
    %v219 = vrot.slane %v205, %v218
    %v220 = vcombine.high %v203, 0.0
    %v222 = vunpack.c.l.s4 1983009808
    %v223 = vunpack.c.0.s8 %v222
    %v224 = vlaneseq
    %v225 = vshrl.u32 %v224, 7
    %v226 = vsub.s32 %v223, %v225
    %v227 = vrot.slane %v203, %v226
    %v229 = vunpack.c.l.s4 1983009808
    %v230 = vunpack.c.0.s8 %v229
    %v231 = vlaneseq
    %v232 = vshrl.u32 %v231, 7
    %v233 = vsub.s32 %v230, %v232
    %v234 = vrot.slane %v220, %v233
    %v235 = vcombine.low %v212, %v227
    %v236 = vcombine.high %v212, %v227
    %v238 = vunpack.c.l.s4 1934713408
    %v239 = vunpack.c.0.s8 %v238
    %v240 = vlaneseq
    %v241 = vshrl.u32 %v240, 7
    %v242 = vsub.s32 %v239, %v241
    %v243 = vrot.slane %v235, %v242
    %v245 = vunpack.c.l.s4 1934713408
    %v246 = vunpack.c.0.s8 %v245
    %v247 = vlaneseq
    %v248 = vshrl.u32 %v247, 7
    %v249 = vsub.s32 %v246, %v248
    %v250 = vrot.slane %v236, %v249
    %v251 = vcombine.low %v219, %v234
    %v252 = vcombine.high %v219, %v234
    %v254 = vunpack.c.l.s4 1934713408
    %v255 = vunpack.c.0.s8 %v254
    %v256 = vlaneseq
    %v257 = vshrl.u32 %v256, 7
    %v258 = vsub.s32 %v255, %v257
    %v259 = vrot.slane %v251, %v258
    %v261 = vunpack.c.l.s4 1934713408
    %v262 = vunpack.c.0.s8 %v261
    %v263 = vlaneseq
    %v264 = vshrl.u32 %v263, 7
    %v265 = vsub.s32 %v262, %v264
    %v266 = vrot.slane %v252, %v265
    %v267 = vcombine.high %v243, 0.0
    %v268 = vcombine.high %v250, 0.0
    %v269 = vcombine.high %v259, 0.0
    %v270 = vcombine.high %v266, 0.0
    %v271 = vcombine.high %v202, 0.0
    %v273 = vunpack.c.l.s4 1983009808
    %v274 = vunpack.c.0.s8 %v273
    %v275 = vlaneseq
    %v276 = vshrl.u32 %v275, 7
    %v277 = vsub.s32 %v274, %v276
    %v278 = vrot.slane %v202, %v277
    %v280 = vunpack.c.l.s4 1983009808
    %v281 = vunpack.c.0.s8 %v280
    %v282 = vlaneseq
    %v283 = vshrl.u32 %v282, 7
    %v284 = vsub.s32 %v281, %v283
    %v285 = vrot.slane %v271, %v284
    %v286 = vcombine.high %v204, 0.0
    %v288 = vunpack.c.l.s4 1983009808
    %v289 = vunpack.c.0.s8 %v288
    %v290 = vlaneseq
    %v291 = vshrl.u32 %v290, 7
    %v292 = vsub.s32 %v289, %v291
    %v293 = vrot.slane %v204, %v292
    %v295 = vunpack.c.l.s4 1983009808
    %v296 = vunpack.c.0.s8 %v295
    %v297 = vlaneseq
    %v298 = vshrl.u32 %v297, 7
    %v299 = vsub.s32 %v296, %v298
    %v300 = vrot.slane %v286, %v299
    %v301 = vcombine.low %v278, %v293
    %v302 = vcombine.high %v278, %v293
    %v304 = vunpack.c.l.s4 1934713408
    %v305 = vunpack.c.0.s8 %v304
    %v306 = vlaneseq
    %v307 = vshrl.u32 %v306, 7
    %v308 = vsub.s32 %v305, %v307
    %v309 = vrot.slane %v301, %v308
    %v311 = vunpack.c.l.s4 1934713408
    %v312 = vunpack.c.0.s8 %v311
    %v313 = vlaneseq
    %v314 = vshrl.u32 %v313, 7
    %v315 = vsub.s32 %v312, %v314
    %v316 = vrot.slane %v302, %v315
    %v317 = vcombine.low %v285, %v300
    %v318 = vcombine.high %v285, %v300
    %v320 = vunpack.c.l.s4 1934713408
    %v321 = vunpack.c.0.s8 %v320
    %v322 = vlaneseq
    %v323 = vshrl.u32 %v322, 7
    %v324 = vsub.s32 %v321, %v323
    %v325 = vrot.slane %v317, %v324
    %v327 = vunpack.c.l.s4 1934713408
    %v328 = vunpack.c.0.s8 %v327
    %v329 = vlaneseq
    %v330 = vshrl.u32 %v329, 7
    %v331 = vsub.s32 %v328, %v330
    %v332 = vrot.slane %v318, %v331
    %v333 = vcombine.high %v309, 0.0
    %v334 = vcombine.high %v316, 0.0
    %v335 = vcombine.high %v325, 0.0
    %v336 = vcombine.high %v332, 0.0
    %v337 = vld [vmem:[%s2] sm:$0xff]
    %v338 = vld [vmem:[%s2 + $0x8] sm:$0xff]
    %v339 = vld [vmem:[%s2 + $0x10] sm:$0xff]
    %v340 = vld [vmem:[%s2 + $0x18] sm:$0xff]
    %v341 = vld [vmem:[%s2 + $0x20] sm:$0xff]
    %v342 = vld [vmem:[%s2 + $0x28] sm:$0xff]
    %v343 = vld [vmem:[%s2 + $0x30] sm:$0xff]
    %v344 = vld [vmem:[%s2 + $0x38] sm:$0xff]
    %v345 = vld [vmem:[%s2 + $0x40] sm:$0xff]
    %v346 = vld [vmem:[%s2 + $0x48] sm:$0xff]
    %v347 = vld [vmem:[%s2 + $0x50] sm:$0xff]
    %v348 = vld [vmem:[%s2 + $0x58] sm:$0xff]
    %v349 = vld [vmem:[%s2 + $0x60] sm:$0xff]
    %v350 = vld [vmem:[%s2 + $0x68] sm:$0xff]
    %v351 = vld [vmem:[%s2 + $0x70] sm:$0xff]
    %v352 = vld [vmem:[%s2 + $0x78] sm:$0xff]
    %v353 = vld [vmem:[%s2 + $0x80] sm:$0xff]
    %v354 = vld [vmem:[%s2 + $0x88] sm:$0xff]
    %v355 = vld [vmem:[%s2 + $0x90] sm:$0xff]
    %v356 = vld [vmem:[%s2 + $0x98] sm:$0xff]
    %v357 = vld [vmem:[%s2 + $0xa0] sm:$0xff]
    %v358 = vld [vmem:[%s2 + $0xa8] sm:$0xff]
    %v359 = vld [vmem:[%s2 + $0xb0] sm:$0xff]
    %v360 = vld [vmem:[%s2 + $0xb8] sm:$0xff]
    %v361 = vld [vmem:[%s2 + $0xc0] sm:$0xff]
    %v362 = vld [vmem:[%s2 + $0xc8] sm:$0xff]
    %v363 = vld [vmem:[%s2 + $0xd0] sm:$0xff]
    %v364 = vld [vmem:[%s2 + $0xd8] sm:$0xff]
    %v365 = vld [vmem:[%s2 + $0xe0] sm:$0xff]
    %v366 = vld [vmem:[%s2 + $0xe8] sm:$0xff]
    %v367 = vld [vmem:[%s2 + $0xf0] sm:$0xff]
    %v368 = vld [vmem:[%s2 + $0xf8] sm:$0xff]
    %v369 = vld [vmem:[%s2 + $0x100] sm:$0xff]
    %v370 = vld [vmem:[%s2 + $0x108] sm:$0xff]
    %v371 = vld [vmem:[%s2 + $0x110] sm:$0xff]
    %v372 = vld [vmem:[%s2 + $0x118] sm:$0xff]
    %v373 = vld [vmem:[%s2 + $0x120] sm:$0xff]
    %v374 = vld [vmem:[%s2 + $0x128] sm:$0xff]
    %v375 = vld [vmem:[%s2 + $0x130] sm:$0xff]
    %v376 = vld [vmem:[%s2 + $0x138] sm:$0xff]
    %v377 = vld [vmem:[%s2 + $0x140] sm:$0xff]
    %v378 = vld [vmem:[%s2 + $0x148] sm:$0xff]
    %v379 = vld [vmem:[%s2 + $0x150] sm:$0xff]
    %v380 = vld [vmem:[%s2 + $0x158] sm:$0xff]
    %v381 = vld [vmem:[%s2 + $0x160] sm:$0xff]
    %v382 = vld [vmem:[%s2 + $0x168] sm:$0xff]
    %v383 = vld [vmem:[%s2 + $0x170] sm:$0xff]
    %v384 = vld [vmem:[%s2 + $0x178] sm:$0xff]
    %v385 = vld [vmem:[%s2 + $0x180] sm:$0xff]
    %v386 = vld [vmem:[%s2 + $0x188] sm:$0xff]
    %v387 = vld [vmem:[%s2 + $0x190] sm:$0xff]
    %v388 = vld [vmem:[%s2 + $0x198] sm:$0xff]
    %v389 = vld [vmem:[%s2 + $0x1a0] sm:$0xff]
    %v390 = vld [vmem:[%s2 + $0x1a8] sm:$0xff]
    %v391 = vld [vmem:[%s2 + $0x1b0] sm:$0xff]
    %v392 = vld [vmem:[%s2 + $0x1b8] sm:$0xff]
    %v393 = vld [vmem:[%s2 + $0x1c0] sm:$0xff]
    %v394 = vld [vmem:[%s2 + $0x1c8] sm:$0xff]
    %v395 = vld [vmem:[%s2 + $0x1d0] sm:$0xff]
    %v396 = vld [vmem:[%s2 + $0x1d8] sm:$0xff]
    %v397 = vld [vmem:[%s2 + $0x1e0] sm:$0xff]
    %v398 = vld [vmem:[%s2 + $0x1e8] sm:$0xff]
    %v399 = vld [vmem:[%s2 + $0x1f0] sm:$0xff]
    %v400 = vld [vmem:[%s2 + $0x1f8] sm:$0xff]
    %401 = vmatprep.subr.mxu0 0.0
    %402 = vmatpush1.xpose.msra.mxu0 0.0
    %403 = vmatprep.subr.mxu0 0.0
    %404 = vmatpush1.xpose.msra.mxu0 0.0
    %405 = vmatprep.subr.mxu0 0.0
    %406 = vmatpush1.xpose.msra.mxu0 0.0
    %407 = vmatprep.subr.mxu0 0.0
    %408 = vmatpush1.xpose.msra.mxu0 0.0
    %409 = vmatprep.subr.mxu0 0.0
    %410 = vmatpush1.xpose.msra.mxu0 0.0
    %411 = vmatprep.subr.mxu0 0.0
    %412 = vmatpush1.xpose.msra.mxu0 0.0
    %413 = vmatprep.subr.mxu0 0.0
    %414 = vmatpush1.xpose.msra.mxu0 0.0
    %415 = vmatprep.subr.mxu0 0.0
    %416 = vmatpush1.xpose.msra.mxu0 0.0
    %417 = vmatprep.subr.mxu0 0.0
    %418 = vmatpush1.xpose.msra.mxu0 0.0
    %419 = vmatprep.subr.mxu0 0.0
    %420 = vmatpush1.xpose.msra.mxu0 0.0
    %421 = vmatprep.subr.mxu0 0.0
    %422 = vmatpush1.xpose.msra.mxu0 0.0
    %423 = vmatprep.subr.mxu0 0.0
    %424 = vmatpush1.xpose.msra.mxu0 0.0
    %425 = vmatprep.subr.mxu0 %v344
    %426 = vmatpush1.xpose.msra.mxu0 %v343
    %427 = vmatprep.subr.mxu0 %v342
    %428 = vmatpush1.xpose.msra.mxu0 %v341
    %429 = vmatprep.subr.mxu0 %v340
    %430 = vmatpush1.xpose.msra.mxu0 %v339
    %431 = vmatprep.subr.mxu0 %v338
    %432 = vmatpush1.xpose.msra.mxu0 %v337
    %433 = vmatprep.subr.mxu0 0.0
    %434 = vmatpush2.xpose.msra.mxu0 0.0
    %435 = vmatprep.subr.mxu0 0.0
    %436 = vmatpush2.xpose.msra.mxu0 0.0
    %437 = vmatprep.subr.mxu0 0.0
    %438 = vmatpush2.xpose.msra.mxu0 0.0
    %439 = vmatprep.subr.mxu0 0.0
    %440 = vmatpush2.xpose.msra.mxu0 0.0
    %441 = vmatprep.subr.mxu0 0.0
    %442 = vmatpush2.xpose.msra.mxu0 0.0
    %443 = vmatprep.subr.mxu0 0.0
    %444 = vmatpush2.xpose.msra.mxu0 0.0
    %445 = vmatprep.subr.mxu0 0.0
    %446 = vmatpush2.xpose.msra.mxu0 0.0
    %447 = vmatprep.subr.mxu0 0.0
    %448 = vmatpush2.xpose.msra.mxu0 0.0
    %449 = vmatprep.subr.mxu0 0.0
    %450 = vmatpush2.xpose.msra.mxu0 0.0
    %451 = vmatprep.subr.mxu0 0.0
    %452 = vmatpush2.xpose.msra.mxu0 0.0
    %453 = vmatprep.subr.mxu0 0.0
    %454 = vmatpush2.xpose.msra.mxu0 0.0
    %455 = vmatprep.subr.mxu0 0.0
    %456 = vmatpush2.xpose.msra.mxu0 0.0
    %457 = vmatprep.subr.mxu0 0.0
    %458 = vmatpush2.xpose.msra.mxu0 0.0
    %459 = vmatprep.subr.mxu0 0.0
    %460 = vmatpush2.xpose.msra.mxu0 0.0
    %461 = vmatprep.subr.mxu0 0.0
    %462 = vmatpush2.xpose.msra.mxu0 0.0
    %463 = vmatprep.subr.mxu0 0.0
    %464 = vmatpush2.xpose.msra.mxu0 0.0
    %465 = vmatprep.mubr.f32.mxu0 %v309
    %466 = vmatmul.mubr.f32.gmra.mxu0 %v243
    %v467 = vpop.f32.mrf.mxu0
    %v468 = vadd.f32 0.0, %v467
    %v469 = vpop.f32.mrf.mxu0
    %470 = vdwg.mxu0
    %471 = vmatprep.subr.mxu0 0.0
    %472 = vmatpush1.xpose.msra.mxu0 0.0
    %473 = vmatprep.subr.mxu0 0.0
    %474 = vmatpush1.xpose.msra.mxu0 0.0
    %475 = vmatprep.subr.mxu0 0.0
    %476 = vmatpush1.xpose.msra.mxu0 0.0
    %477 = vmatprep.subr.mxu0 0.0
    %478 = vmatpush1.xpose.msra.mxu0 0.0
    %479 = vmatprep.subr.mxu0 0.0
    %480 = vmatpush1.xpose.msra.mxu0 0.0
    %481 = vmatprep.subr.mxu0 0.0
    %482 = vmatpush1.xpose.msra.mxu0 0.0
    %483 = vmatprep.subr.mxu0 0.0
    %484 = vmatpush1.xpose.msra.mxu0 0.0
    %485 = vmatprep.subr.mxu0 0.0
    %486 = vmatpush1.xpose.msra.mxu0 0.0
    %487 = vmatprep.subr.mxu0 0.0
    %488 = vmatpush1.xpose.msra.mxu0 0.0
    %489 = vmatprep.subr.mxu0 0.0
    %490 = vmatpush1.xpose.msra.mxu0 0.0
    %491 = vmatprep.subr.mxu0 0.0
    %492 = vmatpush1.xpose.msra.mxu0 0.0
    %493 = vmatprep.subr.mxu0 0.0
    %494 = vmatpush1.xpose.msra.mxu0 0.0
    %495 = vmatprep.subr.mxu0 %v352
    %496 = vmatpush1.xpose.msra.mxu0 %v351
    %497 = vmatprep.subr.mxu0 %v350
    %498 = vmatpush1.xpose.msra.mxu0 %v349
    %499 = vmatprep.subr.mxu0 %v348
    %500 = vmatpush1.xpose.msra.mxu0 %v347
    %501 = vmatprep.subr.mxu0 %v346
    %502 = vmatpush1.xpose.msra.mxu0 %v345
    %503 = vmatprep.subr.mxu0 0.0
    %504 = vmatpush2.xpose.msra.mxu0 0.0
    %505 = vmatprep.subr.mxu0 0.0
    %506 = vmatpush2.xpose.msra.mxu0 0.0
    %507 = vmatprep.subr.mxu0 0.0
    %508 = vmatpush2.xpose.msra.mxu0 0.0
    %509 = vmatprep.subr.mxu0 0.0
    %510 = vmatpush2.xpose.msra.mxu0 0.0
    %511 = vmatprep.subr.mxu0 0.0
    %512 = vmatpush2.xpose.msra.mxu0 0.0
    %513 = vmatprep.subr.mxu0 0.0
    %514 = vmatpush2.xpose.msra.mxu0 0.0
    %515 = vmatprep.subr.mxu0 0.0
    %516 = vmatpush2.xpose.msra.mxu0 0.0
    %517 = vmatprep.subr.mxu0 0.0
    %518 = vmatpush2.xpose.msra.mxu0 0.0
    %519 = vmatprep.subr.mxu0 0.0
    %520 = vmatpush2.xpose.msra.mxu0 0.0
    %521 = vmatprep.subr.mxu0 0.0
    %522 = vmatpush2.xpose.msra.mxu0 0.0
    %523 = vmatprep.subr.mxu0 0.0
    %524 = vmatpush2.xpose.msra.mxu0 0.0
    %525 = vmatprep.subr.mxu0 0.0
    %526 = vmatpush2.xpose.msra.mxu0 0.0
    %527 = vmatprep.subr.mxu0 0.0
    %528 = vmatpush2.xpose.msra.mxu0 0.0
    %529 = vmatprep.subr.mxu0 0.0
    %530 = vmatpush2.xpose.msra.mxu0 0.0
    %531 = vmatprep.subr.mxu0 0.0
    %532 = vmatpush2.xpose.msra.mxu0 0.0
    %533 = vmatprep.subr.mxu0 0.0
    %534 = vmatpush2.xpose.msra.mxu0 0.0
    %535 = vmatprep.mubr.f32.mxu0 %v333
    %536 = vmatmul.mubr.f32.gmra.mxu0 %v267
    %v537 = vpop.f32.mrf.mxu0
    %v538 = vadd.f32 0.0, %v537
    %v539 = vpop.f32.mrf.mxu0
    %540 = vdwg.mxu0
    %541 = vmatprep.subr.mxu0 0.0
    %542 = vmatpush1.xpose.msra.mxu0 0.0
    %543 = vmatprep.subr.mxu0 0.0
    %544 = vmatpush1.xpose.msra.mxu0 0.0
    %545 = vmatprep.subr.mxu0 0.0
    %546 = vmatpush1.xpose.msra.mxu0 0.0
    %547 = vmatprep.subr.mxu0 0.0
    %548 = vmatpush1.xpose.msra.mxu0 0.0
    %549 = vmatprep.subr.mxu0 0.0
    %550 = vmatpush1.xpose.msra.mxu0 0.0
    %551 = vmatprep.subr.mxu0 0.0
    %552 = vmatpush1.xpose.msra.mxu0 0.0
    %553 = vmatprep.subr.mxu0 0.0
    %554 = vmatpush1.xpose.msra.mxu0 0.0
    %555 = vmatprep.subr.mxu0 0.0
    %556 = vmatpush1.xpose.msra.mxu0 0.0
    %557 = vmatprep.subr.mxu0 0.0
    %558 = vmatpush1.xpose.msra.mxu0 0.0
    %559 = vmatprep.subr.mxu0 0.0
    %560 = vmatpush1.xpose.msra.mxu0 0.0
    %561 = vmatprep.subr.mxu0 0.0
    %562 = vmatpush1.xpose.msra.mxu0 0.0
    %563 = vmatprep.subr.mxu0 0.0
    %564 = vmatpush1.xpose.msra.mxu0 0.0
    %565 = vmatprep.subr.mxu0 %v360
    %566 = vmatpush1.xpose.msra.mxu0 %v359
    %567 = vmatprep.subr.mxu0 %v358
    %568 = vmatpush1.xpose.msra.mxu0 %v357
    %569 = vmatprep.subr.mxu0 %v356
    %570 = vmatpush1.xpose.msra.mxu0 %v355
    %571 = vmatprep.subr.mxu0 %v354
    %572 = vmatpush1.xpose.msra.mxu0 %v353
    %573 = vmatprep.subr.mxu0 0.0
    %574 = vmatpush2.xpose.msra.mxu0 0.0
    %575 = vmatprep.subr.mxu0 0.0
    %576 = vmatpush2.xpose.msra.mxu0 0.0
    %577 = vmatprep.subr.mxu0 0.0
    %578 = vmatpush2.xpose.msra.mxu0 0.0
    %579 = vmatprep.subr.mxu0 0.0
    %580 = vmatpush2.xpose.msra.mxu0 0.0
    %581 = vmatprep.subr.mxu0 0.0
    %582 = vmatpush2.xpose.msra.mxu0 0.0
    %583 = vmatprep.subr.mxu0 0.0
    %584 = vmatpush2.xpose.msra.mxu0 0.0
    %585 = vmatprep.subr.mxu0 0.0
    %586 = vmatpush2.xpose.msra.mxu0 0.0
    %587 = vmatprep.subr.mxu0 0.0
    %588 = vmatpush2.xpose.msra.mxu0 0.0
    %589 = vmatprep.subr.mxu0 0.0
    %590 = vmatpush2.xpose.msra.mxu0 0.0
    %591 = vmatprep.subr.mxu0 0.0
    %592 = vmatpush2.xpose.msra.mxu0 0.0
    %593 = vmatprep.subr.mxu0 0.0
    %594 = vmatpush2.xpose.msra.mxu0 0.0
    %595 = vmatprep.subr.mxu0 0.0
    %596 = vmatpush2.xpose.msra.mxu0 0.0
    %597 = vmatprep.subr.mxu0 0.0
    %598 = vmatpush2.xpose.msra.mxu0 0.0
    %599 = vmatprep.subr.mxu0 0.0
    %600 = vmatpush2.xpose.msra.mxu0 0.0
    %601 = vmatprep.subr.mxu0 0.0
    %602 = vmatpush2.xpose.msra.mxu0 0.0
    %603 = vmatprep.subr.mxu0 0.0
    %604 = vmatpush2.xpose.msra.mxu0 0.0
    %605 = vmatprep.mubr.f32.mxu0 %v316
    %606 = vmatmul.mubr.f32.gmra.mxu0 %v250
    %v607 = vpop.f32.mrf.mxu0
    %v608 = vadd.f32 0.0, %v607
    %v609 = vpop.f32.mrf.mxu0
    %610 = vdwg.mxu0
    %611 = vmatprep.subr.mxu0 0.0
    %612 = vmatpush1.xpose.msra.mxu0 0.0
    %613 = vmatprep.subr.mxu0 0.0
    %614 = vmatpush1.xpose.msra.mxu0 0.0
    %615 = vmatprep.subr.mxu0 0.0
    %616 = vmatpush1.xpose.msra.mxu0 0.0
    %617 = vmatprep.subr.mxu0 0.0
    %618 = vmatpush1.xpose.msra.mxu0 0.0
    %619 = vmatprep.subr.mxu0 0.0
    %620 = vmatpush1.xpose.msra.mxu0 0.0
    %621 = vmatprep.subr.mxu0 0.0
    %622 = vmatpush1.xpose.msra.mxu0 0.0
    %623 = vmatprep.subr.mxu0 0.0
    %624 = vmatpush1.xpose.msra.mxu0 0.0
    %625 = vmatprep.subr.mxu0 0.0
    %626 = vmatpush1.xpose.msra.mxu0 0.0
    %627 = vmatprep.subr.mxu0 0.0
    %628 = vmatpush1.xpose.msra.mxu0 0.0
    %629 = vmatprep.subr.mxu0 0.0
    %630 = vmatpush1.xpose.msra.mxu0 0.0
    %631 = vmatprep.subr.mxu0 0.0
    %632 = vmatpush1.xpose.msra.mxu0 0.0
    %633 = vmatprep.subr.mxu0 0.0
    %634 = vmatpush1.xpose.msra.mxu0 0.0
    %635 = vmatprep.subr.mxu0 %v368
    %636 = vmatpush1.xpose.msra.mxu0 %v367
    %637 = vmatprep.subr.mxu0 %v366
    %638 = vmatpush1.xpose.msra.mxu0 %v365
    %639 = vmatprep.subr.mxu0 %v364
    %640 = vmatpush1.xpose.msra.mxu0 %v363
    %641 = vmatprep.subr.mxu0 %v362
    %642 = vmatpush1.xpose.msra.mxu0 %v361
    %643 = vmatprep.subr.mxu0 0.0
    %644 = vmatpush2.xpose.msra.mxu0 0.0
    %645 = vmatprep.subr.mxu0 0.0
    %646 = vmatpush2.xpose.msra.mxu0 0.0
    %647 = vmatprep.subr.mxu0 0.0
    %648 = vmatpush2.xpose.msra.mxu0 0.0
    %649 = vmatprep.subr.mxu0 0.0
    %650 = vmatpush2.xpose.msra.mxu0 0.0
    %651 = vmatprep.subr.mxu0 0.0
    %652 = vmatpush2.xpose.msra.mxu0 0.0
    %653 = vmatprep.subr.mxu0 0.0
    %654 = vmatpush2.xpose.msra.mxu0 0.0
    %655 = vmatprep.subr.mxu0 0.0
    %656 = vmatpush2.xpose.msra.mxu0 0.0
    %657 = vmatprep.subr.mxu0 0.0
    %658 = vmatpush2.xpose.msra.mxu0 0.0
    %659 = vmatprep.subr.mxu0 0.0
    %660 = vmatpush2.xpose.msra.mxu0 0.0
    %661 = vmatprep.subr.mxu0 0.0
    %662 = vmatpush2.xpose.msra.mxu0 0.0
    %663 = vmatprep.subr.mxu0 0.0
    %664 = vmatpush2.xpose.msra.mxu0 0.0
    %665 = vmatprep.subr.mxu0 0.0
    %666 = vmatpush2.xpose.msra.mxu0 0.0
    %667 = vmatprep.subr.mxu0 0.0
    %668 = vmatpush2.xpose.msra.mxu0 0.0
    %669 = vmatprep.subr.mxu0 0.0
    %670 = vmatpush2.xpose.msra.mxu0 0.0
    %671 = vmatprep.subr.mxu0 0.0
    %672 = vmatpush2.xpose.msra.mxu0 0.0
    %673 = vmatprep.subr.mxu0 0.0
    %674 = vmatpush2.xpose.msra.mxu0 0.0
    %675 = vmatprep.mubr.f32.mxu0 %v334
    %676 = vmatmul.mubr.f32.gmra.mxu0 %v268
    %v677 = vpop.f32.mrf.mxu0
    %v678 = vadd.f32 0.0, %v677
    %v679 = vpop.f32.mrf.mxu0
    %680 = vdwg.mxu0
    %681 = vmatprep.subr.mxu0 0.0
    %682 = vmatpush1.xpose.msra.mxu0 0.0
    %683 = vmatprep.subr.mxu0 0.0
    %684 = vmatpush1.xpose.msra.mxu0 0.0
    %685 = vmatprep.subr.mxu0 0.0
    %686 = vmatpush1.xpose.msra.mxu0 0.0
    %687 = vmatprep.subr.mxu0 0.0
    %688 = vmatpush1.xpose.msra.mxu0 0.0
    %689 = vmatprep.subr.mxu0 0.0
    %690 = vmatpush1.xpose.msra.mxu0 0.0
    %691 = vmatprep.subr.mxu0 0.0
    %692 = vmatpush1.xpose.msra.mxu0 0.0
    %693 = vmatprep.subr.mxu0 0.0
    %694 = vmatpush1.xpose.msra.mxu0 0.0
    %695 = vmatprep.subr.mxu0 0.0
    %696 = vmatpush1.xpose.msra.mxu0 0.0
    %697 = vmatprep.subr.mxu0 0.0
    %698 = vmatpush1.xpose.msra.mxu0 0.0
    %699 = vmatprep.subr.mxu0 0.0
    %700 = vmatpush1.xpose.msra.mxu0 0.0
    %701 = vmatprep.subr.mxu0 0.0
    %702 = vmatpush1.xpose.msra.mxu0 0.0
    %703 = vmatprep.subr.mxu0 0.0
    %704 = vmatpush1.xpose.msra.mxu0 0.0
    %705 = vmatprep.subr.mxu0 %v376
    %706 = vmatpush1.xpose.msra.mxu0 %v375
    %707 = vmatprep.subr.mxu0 %v374
    %708 = vmatpush1.xpose.msra.mxu0 %v373
    %709 = vmatprep.subr.mxu0 %v372
    %710 = vmatpush1.xpose.msra.mxu0 %v371
    %711 = vmatprep.subr.mxu0 %v370
    %712 = vmatpush1.xpose.msra.mxu0 %v369
    %713 = vmatprep.subr.mxu0 0.0
    %714 = vmatpush2.xpose.msra.mxu0 0.0
    %715 = vmatprep.subr.mxu0 0.0
    %716 = vmatpush2.xpose.msra.mxu0 0.0
    %717 = vmatprep.subr.mxu0 0.0
    %718 = vmatpush2.xpose.msra.mxu0 0.0
    %719 = vmatprep.subr.mxu0 0.0
    %720 = vmatpush2.xpose.msra.mxu0 0.0
    %721 = vmatprep.subr.mxu0 0.0
    %722 = vmatpush2.xpose.msra.mxu0 0.0
    %723 = vmatprep.subr.mxu0 0.0
    %724 = vmatpush2.xpose.msra.mxu0 0.0
    %725 = vmatprep.subr.mxu0 0.0
    %726 = vmatpush2.xpose.msra.mxu0 0.0
    %727 = vmatprep.subr.mxu0 0.0
    %728 = vmatpush2.xpose.msra.mxu0 0.0
    %729 = vmatprep.subr.mxu0 0.0
    %730 = vmatpush2.xpose.msra.mxu0 0.0
    %731 = vmatprep.subr.mxu0 0.0
    %732 = vmatpush2.xpose.msra.mxu0 0.0
    %733 = vmatprep.subr.mxu0 0.0
    %734 = vmatpush2.xpose.msra.mxu0 0.0
    %735 = vmatprep.subr.mxu0 0.0
    %736 = vmatpush2.xpose.msra.mxu0 0.0
    %737 = vmatprep.subr.mxu0 0.0
    %738 = vmatpush2.xpose.msra.mxu0 0.0
    %739 = vmatprep.subr.mxu0 0.0
    %740 = vmatpush2.xpose.msra.mxu0 0.0
    %741 = vmatprep.subr.mxu0 0.0
    %742 = vmatpush2.xpose.msra.mxu0 0.0
    %743 = vmatprep.subr.mxu0 0.0
    %744 = vmatpush2.xpose.msra.mxu0 0.0
    %745 = vmatprep.mubr.f32.mxu0 %v325
    %746 = vmatmul.mubr.f32.gmra.mxu0 %v259
    %v747 = vpop.f32.mrf.mxu0
    %v748 = vadd.f32 0.0, %v747
    %v749 = vpop.f32.mrf.mxu0
    %750 = vdwg.mxu0
    %751 = vmatprep.subr.mxu0 0.0
    %752 = vmatpush1.xpose.msra.mxu0 0.0
    %753 = vmatprep.subr.mxu0 0.0
    %754 = vmatpush1.xpose.msra.mxu0 0.0
    %755 = vmatprep.subr.mxu0 0.0
    %756 = vmatpush1.xpose.msra.mxu0 0.0
    %757 = vmatprep.subr.mxu0 0.0
    %758 = vmatpush1.xpose.msra.mxu0 0.0
    %759 = vmatprep.subr.mxu0 0.0
    %760 = vmatpush1.xpose.msra.mxu0 0.0
    %761 = vmatprep.subr.mxu0 0.0
    %762 = vmatpush1.xpose.msra.mxu0 0.0
    %763 = vmatprep.subr.mxu0 0.0
    %764 = vmatpush1.xpose.msra.mxu0 0.0
    %765 = vmatprep.subr.mxu0 0.0
    %766 = vmatpush1.xpose.msra.mxu0 0.0
    %767 = vmatprep.subr.mxu0 0.0
    %768 = vmatpush1.xpose.msra.mxu0 0.0
    %769 = vmatprep.subr.mxu0 0.0
    %770 = vmatpush1.xpose.msra.mxu0 0.0
    %771 = vmatprep.subr.mxu0 0.0
    %772 = vmatpush1.xpose.msra.mxu0 0.0
    %773 = vmatprep.subr.mxu0 0.0
    %774 = vmatpush1.xpose.msra.mxu0 0.0
    %775 = vmatprep.subr.mxu0 %v384
    %776 = vmatpush1.xpose.msra.mxu0 %v383
    %777 = vmatprep.subr.mxu0 %v382
    %778 = vmatpush1.xpose.msra.mxu0 %v381
    %779 = vmatprep.subr.mxu0 %v380
    %780 = vmatpush1.xpose.msra.mxu0 %v379
    %781 = vmatprep.subr.mxu0 %v378
    %782 = vmatpush1.xpose.msra.mxu0 %v377
    %783 = vmatprep.subr.mxu0 0.0
    %784 = vmatpush2.xpose.msra.mxu0 0.0
    %785 = vmatprep.subr.mxu0 0.0
    %786 = vmatpush2.xpose.msra.mxu0 0.0
    %787 = vmatprep.subr.mxu0 0.0
    %788 = vmatpush2.xpose.msra.mxu0 0.0
    %789 = vmatprep.subr.mxu0 0.0
    %790 = vmatpush2.xpose.msra.mxu0 0.0
    %791 = vmatprep.subr.mxu0 0.0
    %792 = vmatpush2.xpose.msra.mxu0 0.0
    %793 = vmatprep.subr.mxu0 0.0
    %794 = vmatpush2.xpose.msra.mxu0 0.0
    %795 = vmatprep.subr.mxu0 0.0
    %796 = vmatpush2.xpose.msra.mxu0 0.0
    %797 = vmatprep.subr.mxu0 0.0
    %798 = vmatpush2.xpose.msra.mxu0 0.0
    %799 = vmatprep.subr.mxu0 0.0
    %800 = vmatpush2.xpose.msra.mxu0 0.0
    %801 = vmatprep.subr.mxu0 0.0
    %802 = vmatpush2.xpose.msra.mxu0 0.0
    %803 = vmatprep.subr.mxu0 0.0
    %804 = vmatpush2.xpose.msra.mxu0 0.0
    %805 = vmatprep.subr.mxu0 0.0
    %806 = vmatpush2.xpose.msra.mxu0 0.0
    %807 = vmatprep.subr.mxu0 0.0
    %808 = vmatpush2.xpose.msra.mxu0 0.0
    %809 = vmatprep.subr.mxu0 0.0
    %810 = vmatpush2.xpose.msra.mxu0 0.0
    %811 = vmatprep.subr.mxu0 0.0
    %812 = vmatpush2.xpose.msra.mxu0 0.0
    %813 = vmatprep.subr.mxu0 0.0
    %814 = vmatpush2.xpose.msra.mxu0 0.0
    %815 = vmatprep.mubr.f32.mxu0 %v335
    %816 = vmatmul.mubr.f32.gmra.mxu0 %v269
    %v817 = vpop.f32.mrf.mxu0
    %v818 = vadd.f32 0.0, %v817
    %v819 = vpop.f32.mrf.mxu0
    %820 = vdwg.mxu0
    %821 = vmatprep.subr.mxu0 0.0
    %822 = vmatpush1.xpose.msra.mxu0 0.0
    %823 = vmatprep.subr.mxu0 0.0
    %824 = vmatpush1.xpose.msra.mxu0 0.0
    %825 = vmatprep.subr.mxu0 0.0
    %826 = vmatpush1.xpose.msra.mxu0 0.0
    %827 = vmatprep.subr.mxu0 0.0
    %828 = vmatpush1.xpose.msra.mxu0 0.0
    %829 = vmatprep.subr.mxu0 0.0
    %830 = vmatpush1.xpose.msra.mxu0 0.0
    %831 = vmatprep.subr.mxu0 0.0
    %832 = vmatpush1.xpose.msra.mxu0 0.0
    %833 = vmatprep.subr.mxu0 0.0
    %834 = vmatpush1.xpose.msra.mxu0 0.0
    %835 = vmatprep.subr.mxu0 0.0
    %836 = vmatpush1.xpose.msra.mxu0 0.0
    %837 = vmatprep.subr.mxu0 0.0
    %838 = vmatpush1.xpose.msra.mxu0 0.0
    %839 = vmatprep.subr.mxu0 0.0
    %840 = vmatpush1.xpose.msra.mxu0 0.0
    %841 = vmatprep.subr.mxu0 0.0
    %842 = vmatpush1.xpose.msra.mxu0 0.0
    %843 = vmatprep.subr.mxu0 0.0
    %844 = vmatpush1.xpose.msra.mxu0 0.0
    %845 = vmatprep.subr.mxu0 %v392
    %846 = vmatpush1.xpose.msra.mxu0 %v391
    %847 = vmatprep.subr.mxu0 %v390
    %848 = vmatpush1.xpose.msra.mxu0 %v389
    %849 = vmatprep.subr.mxu0 %v388
    %850 = vmatpush1.xpose.msra.mxu0 %v387
    %851 = vmatprep.subr.mxu0 %v386
    %852 = vmatpush1.xpose.msra.mxu0 %v385
    %853 = vmatprep.subr.mxu0 0.0
    %854 = vmatpush2.xpose.msra.mxu0 0.0
    %855 = vmatprep.subr.mxu0 0.0
    %856 = vmatpush2.xpose.msra.mxu0 0.0
    %857 = vmatprep.subr.mxu0 0.0
    %858 = vmatpush2.xpose.msra.mxu0 0.0
    %859 = vmatprep.subr.mxu0 0.0
    %860 = vmatpush2.xpose.msra.mxu0 0.0
    %861 = vmatprep.subr.mxu0 0.0
    %862 = vmatpush2.xpose.msra.mxu0 0.0
    %863 = vmatprep.subr.mxu0 0.0
    %864 = vmatpush2.xpose.msra.mxu0 0.0
    %865 = vmatprep.subr.mxu0 0.0
    %866 = vmatpush2.xpose.msra.mxu0 0.0
    %867 = vmatprep.subr.mxu0 0.0
    %868 = vmatpush2.xpose.msra.mxu0 0.0
    %869 = vmatprep.subr.mxu0 0.0
    %870 = vmatpush2.xpose.msra.mxu0 0.0
    %871 = vmatprep.subr.mxu0 0.0
    %872 = vmatpush2.xpose.msra.mxu0 0.0
    %873 = vmatprep.subr.mxu0 0.0
    %874 = vmatpush2.xpose.msra.mxu0 0.0
    %875 = vmatprep.subr.mxu0 0.0
    %876 = vmatpush2.xpose.msra.mxu0 0.0
    %877 = vmatprep.subr.mxu0 0.0
    %878 = vmatpush2.xpose.msra.mxu0 0.0
    %879 = vmatprep.subr.mxu0 0.0
    %880 = vmatpush2.xpose.msra.mxu0 0.0
    %881 = vmatprep.subr.mxu0 0.0
    %882 = vmatpush2.xpose.msra.mxu0 0.0
    %883 = vmatprep.subr.mxu0 0.0
    %884 = vmatpush2.xpose.msra.mxu0 0.0
    %885 = vmatprep.mubr.f32.mxu0 %v332
    %886 = vmatmul.mubr.f32.gmra.mxu0 %v266
    %v887 = vpop.f32.mrf.mxu0
    %v888 = vadd.f32 0.0, %v887
    %v889 = vpop.f32.mrf.mxu0
    %890 = vdwg.mxu0
    %891 = vmatprep.subr.mxu0 0.0
    %892 = vmatpush1.xpose.msra.mxu0 0.0
    %893 = vmatprep.subr.mxu0 0.0
    %894 = vmatpush1.xpose.msra.mxu0 0.0
    %895 = vmatprep.subr.mxu0 0.0
    %896 = vmatpush1.xpose.msra.mxu0 0.0
    %897 = vmatprep.subr.mxu0 0.0
    %898 = vmatpush1.xpose.msra.mxu0 0.0
    %899 = vmatprep.subr.mxu0 0.0
    %900 = vmatpush1.xpose.msra.mxu0 0.0
    %901 = vmatprep.subr.mxu0 0.0
    %902 = vmatpush1.xpose.msra.mxu0 0.0
    %903 = vmatprep.subr.mxu0 0.0
    %904 = vmatpush1.xpose.msra.mxu0 0.0
    %905 = vmatprep.subr.mxu0 0.0
    %906 = vmatpush1.xpose.msra.mxu0 0.0
    %907 = vmatprep.subr.mxu0 0.0
    %908 = vmatpush1.xpose.msra.mxu0 0.0
    %909 = vmatprep.subr.mxu0 0.0
    %910 = vmatpush1.xpose.msra.mxu0 0.0
    %911 = vmatprep.subr.mxu0 0.0
    %912 = vmatpush1.xpose.msra.mxu0 0.0
    %913 = vmatprep.subr.mxu0 0.0
    %914 = vmatpush1.xpose.msra.mxu0 0.0
    %915 = vmatprep.subr.mxu0 %v400
    %916 = vmatpush1.xpose.msra.mxu0 %v399
    %917 = vmatprep.subr.mxu0 %v398
    %918 = vmatpush1.xpose.msra.mxu0 %v397
    %919 = vmatprep.subr.mxu0 %v396
    %920 = vmatpush1.xpose.msra.mxu0 %v395
    %921 = vmatprep.subr.mxu0 %v394
    %922 = vmatpush1.xpose.msra.mxu0 %v393
    %923 = vmatprep.subr.mxu0 0.0
    %924 = vmatpush2.xpose.msra.mxu0 0.0
    %925 = vmatprep.subr.mxu0 0.0
    %926 = vmatpush2.xpose.msra.mxu0 0.0
    %927 = vmatprep.subr.mxu0 0.0
    %928 = vmatpush2.xpose.msra.mxu0 0.0
    %929 = vmatprep.subr.mxu0 0.0
    %930 = vmatpush2.xpose.msra.mxu0 0.0
    %931 = vmatprep.subr.mxu0 0.0
    %932 = vmatpush2.xpose.msra.mxu0 0.0
    %933 = vmatprep.subr.mxu0 0.0
    %934 = vmatpush2.xpose.msra.mxu0 0.0
    %935 = vmatprep.subr.mxu0 0.0
    %936 = vmatpush2.xpose.msra.mxu0 0.0
    %937 = vmatprep.subr.mxu0 0.0
    %938 = vmatpush2.xpose.msra.mxu0 0.0
    %939 = vmatprep.subr.mxu0 0.0
    %940 = vmatpush2.xpose.msra.mxu0 0.0
    %941 = vmatprep.subr.mxu0 0.0
    %942 = vmatpush2.xpose.msra.mxu0 0.0
    %943 = vmatprep.subr.mxu0 0.0
    %944 = vmatpush2.xpose.msra.mxu0 0.0
    %945 = vmatprep.subr.mxu0 0.0
    %946 = vmatpush2.xpose.msra.mxu0 0.0
    %947 = vmatprep.subr.mxu0 0.0
    %948 = vmatpush2.xpose.msra.mxu0 0.0
    %949 = vmatprep.subr.mxu0 0.0
    %950 = vmatpush2.xpose.msra.mxu0 0.0
    %951 = vmatprep.subr.mxu0 0.0
    %952 = vmatpush2.xpose.msra.mxu0 0.0
    %953 = vmatprep.subr.mxu0 0.0
    %954 = vmatpush2.xpose.msra.mxu0 0.0
    %955 = vmatprep.mubr.f32.mxu0 %v336
    %956 = vmatmul.mubr.f32.gmra.mxu0 %v270
    %v957 = vpop.f32.mrf.mxu0
    %v958 = vadd.f32 0.0, %v957
    %v959 = vpop.f32.mrf.mxu0
    %960 = vdwg.mxu0
    %vm961 = vcmask 254976
    %v962 = vsel %vm961, %v468, 0.0
    %v963 = vsel %vm961, %v538, 0.0
    %v964 = vadd.f32 %v962, %v963
    %v965 = vsel %vm961, %v608, 0.0
    %v966 = vadd.f32 %v964, %v965
    %v967 = vsel %vm961, %v678, 0.0
    %v968 = vadd.f32 %v966, %v967
    %v969 = vsel %vm961, %v748, 0.0
    %v970 = vadd.f32 %v968, %v969
    %v971 = vsel %vm961, %v818, 0.0
    %v972 = vadd.f32 %v970, %v971
    %v973 = vsel %vm961, %v888, 0.0
    %v974 = vadd.f32 %v972, %v973
    %v975 = vsel %vm961, %v958, 0.0
    %v976 = vadd.f32 %v974, %v975
    %v977 = vld [vmem:[%s3] sm:$0x1]
    %v978 = vld [vmem:[%s3 + $0x1] sm:$0x1]
    %v979 = vlaneseq
    %v980 = vshrl.u32 %v979, 7
    %v981 = vsub.s32 0, %v980
    %v982 = vrot.slane %v977, %v981
    %v983 = vadd.f32 %v976, %v982
    %v984 = vmax.f32 %v983, 0.0
    %v985 = vld [vmem:[%s4] sm:$0xff]
    %v986 = vld [vmem:[%s4 + $0x8] sm:$0xff]
    %v987 = vld [vmem:[%s4 + $0x10] sm:$0xff]
    %v988 = vld [vmem:[%s4 + $0x18] sm:$0xff]
    %v989 = vlaneseq
    %v990 = vshrl.u32 %v989, 7
    %v991 = vsub.s32 0, %v990
    %v992 = vrot.slane %v978, %v991
    %vm993 = vcmask 261120
    %v995 = vsel %vm993, %v984, 0
    %997 = vmatprep.subr.mxu0 0.0
    %998 = vmatpush1.msra.mxu0 0.0
    %999 = vmatprep.subr.mxu0 0.0
    %1000 = vmatpush1.msra.mxu0 0.0
    %1001 = vmatprep.subr.mxu0 0.0
    %1002 = vmatpush1.msra.mxu0 0.0
    %1003 = vmatprep.subr.mxu0 0.0
    %1004 = vmatpush1.msra.mxu0 0.0
    %1005 = vmatprep.subr.mxu0 0.0
    %1006 = vmatpush1.msra.mxu0 0.0
    %1007 = vmatprep.subr.mxu0 0.0
    %1008 = vmatpush1.msra.mxu0 0.0
    %1009 = vmatprep.subr.mxu0 0.0
    %1010 = vmatpush1.msra.mxu0 0.0
    %1011 = vmatprep.subr.mxu0 0.0
    %1012 = vmatpush1.msra.mxu0 0.0
    %1013 = vmatprep.subr.mxu0 0.0
    %1014 = vmatpush1.msra.mxu0 0.0
    %1015 = vmatprep.subr.mxu0 0.0
    %1016 = vmatpush1.msra.mxu0 0.0
    %1017 = vmatprep.subr.mxu0 0.0
    %1018 = vmatpush1.msra.mxu0 0.0
    %1019 = vmatprep.subr.mxu0 0.0
    %1020 = vmatpush1.msra.mxu0 0.0
    %1021 = vmatprep.subr.mxu0 0.0
    %1022 = vmatpush1.msra.mxu0 %v988
    %1023 = vmatprep.subr.mxu0 0.0
    %1024 = vmatpush1.msra.mxu0 %v987
    %1025 = vmatprep.subr.mxu0 0.0
    %1026 = vmatpush1.msra.mxu0 %v986
    %1027 = vmatprep.subr.mxu0 0.0
    %1028 = vmatpush1.msra.mxu0 %v985
    %1029 = vmatprep.subr.mxu0 0.0
    %1030 = vmatpush2.msra.mxu0 0.0
    %1031 = vmatprep.subr.mxu0 0.0
    %1032 = vmatpush2.msra.mxu0 0.0
    %1033 = vmatprep.subr.mxu0 0.0
    %1034 = vmatpush2.msra.mxu0 0.0
    %1035 = vmatprep.subr.mxu0 0.0
    %1036 = vmatpush2.msra.mxu0 0.0
    %1037 = vmatprep.subr.mxu0 0.0
    %1038 = vmatpush2.msra.mxu0 0.0
    %1039 = vmatprep.subr.mxu0 0.0
    %1040 = vmatpush2.msra.mxu0 0.0
    %1041 = vmatprep.subr.mxu0 0.0
    %1042 = vmatpush2.msra.mxu0 0.0
    %1043 = vmatprep.subr.mxu0 0.0
    %1044 = vmatpush2.msra.mxu0 0.0
    %1045 = vmatprep.subr.mxu0 0.0
    %1046 = vmatpush2.msra.mxu0 0.0
    %1047 = vmatprep.subr.mxu0 0.0
    %1048 = vmatpush2.msra.mxu0 0.0
    %1049 = vmatprep.subr.mxu0 0.0
    %1050 = vmatpush2.msra.mxu0 0.0
    %1051 = vmatprep.subr.mxu0 0.0
    %1052 = vmatpush2.msra.mxu0 0.0
    %1053 = vmatprep.subr.mxu0 0.0
    %1054 = vmatpush2.msra.mxu0 0.0
    %1055 = vmatprep.subr.mxu0 0.0
    %1056 = vmatpush2.msra.mxu0 0.0
    %1057 = vmatprep.subr.mxu0 0.0
    %1058 = vmatpush2.msra.mxu0 0.0
    %1059 = vmatprep.subr.mxu0 0.0
    %1060 = vmatpush2.msra.mxu0 0.0
    %1061 = vmatprep.mubr.f32.mxu0 0.0
    %1062 = vmatmul.mubr.f32.gmra.mxu0 %v995
    %v1063 = vpop.f32.mrf.mxu0
    %v1064 = vadd.f32 %v992, %v1063
    %v1065 = vpop.f32.mrf.mxu0
    %1066 = vdwg.mxu0
    %vm1067 = vcmask 25600
    %1068 = vst.msk [vmem:[#allocation2] sm:$0x3] %vm1067, %v1064
    // Predicated region
    $region22: #{dqn_forward.1} parent=1 // pred_check
      _
    $region23: #{dqn_forward.1} parent=1 // pred_check_branch
      %1070 = sbr.rel (0) target = $region25
    $region24: #{dqn_forward.1} parent=1 // pred_region
      %s1072 = ssub.s32 32, 32
      %1073 = vsyncadd [#allocation3], %s1072
      %s1075 = sshll.u32 [#allocation2], 4
      %s1076 = int_to_ptr.vmem [resolvable:$true] %s1075
      %1078 = dma.vmem_to_hbm [thread:$0]  %s1076, 32, %s5, [#allocation3]
    $region25: #{dqn_forward.1} parent=1 // pred_fallthru
      _
    // Predicated region
    $region26: #{dqn_forward.1} parent=1 // pred_check
      _
    $region27: #{dqn_forward.1} parent=1 // pred_check_branch
      %1080 = sbr.rel (0) target = $region29
    $region28: #{dqn_forward.1} parent=1 // pred_region
      %1081 = dma.done [#allocation3], 32
    $region29: #{dqn_forward.1} parent=1 // pred_fallthru
      _
    %1082 = vsyncpa [#allocation3], 1

</llo_original>
